<compile_context>
chip_gen: v6e
topology: v6e:2x2x1
jax: 0.10.0
libtpu: 0.0.40
codegen_flags: <defaults>
</compile_context>

<pallas_src>
import math
from functools import partial

import jax
import jax.numpy as jnp
from jax.experimental import pallas as pl
from jax.experimental.pallas import tpu as pltpu


# --------------------------------------------------------------------------- #
# Projection kernel: y = x @ W + b, tiled over (batch, sequence).             #
# --------------------------------------------------------------------------- #
def _linear_kernel(x_ref, w_ref, b_ref, o_ref):
    x = x_ref[0]                                             # (ts, H)
    y = jnp.dot(x, w_ref[...], preferred_element_type=jnp.float32) + b_ref[...]
    o_ref[0] = y.astype(o_ref.dtype)


def _linear(x, w, b, *, tile_s, out_dtype):
    """x: (B, S, H), w: (H, N), b: (1, N) f32 -> (B, S, N) in out_dtype."""
    B, S, H = x.shape
    N = w.shape[1]
    ts = min(tile_s, S)
    assert S % ts == 0, f"S={S} must be divisible by projection tile {ts}"
    return pl.pallas_call(
        _linear_kernel,
        out_shape=jax.ShapeDtypeStruct((B, S, N), out_dtype),
        grid_spec=pltpu.PrefetchScalarGridSpec(
            num_scalar_prefetch=0,
            grid=(B, S // ts),
            in_specs=[
                pl.BlockSpec((1, ts, H), lambda bi, si: (bi, si, 0)),
                pl.BlockSpec((H, N), lambda bi, si: (0, 0)),   # weight: DMA'd once
                pl.BlockSpec((1, N), lambda bi, si: (0, 0)),   # bias:   DMA'd once
            ],
            out_specs=pl.BlockSpec((1, ts, N), lambda bi, si: (bi, si, 0)),
        ),
        compiler_params=pltpu.CompilerParams(
            dimension_semantics=("parallel", "parallel")),
    )(x, w, b)


# --------------------------------------------------------------------------- #
# Flash-attention kernel (online softmax over KV tiles).                      #
# --------------------------------------------------------------------------- #
def _flash_attn_kernel(q_ref, k_ref, v_ref, o_ref, m_sc, l_sc, acc_sc,
                       *, num_heads, compute_dtype):
    ki = pl.program_id(2)
    nk = pl.num_programs(2)

    @pl.when(ki == 0)
    def _init():
        m_sc[...] = jnp.full(m_sc.shape, -jnp.inf, dtype=m_sc.dtype)
        l_sc[...] = jnp.zeros(l_sc.shape, dtype=l_sc.dtype)
        acc_sc[...] = jnp.zeros(acc_sc.shape, dtype=acc_sc.dtype)

    q = q_ref[0]                                             # (nh, tq, hd), scale pre-folded
    k = k_ref[0]                                             # (nh, tk, hd)
    v = v_ref[0]                                             # (nh, tk, hd)

    # Batched per-head scores on the MXU, f32 accumulation.
    s = jnp.einsum('hqd,hkd->hqk', q, k,
                   preferred_element_type=jnp.float32)       # (nh, tq, tk)

    m_prev = m_sc[...]                                       # (nh, tq, 1)
    m_new = jnp.maximum(m_prev, jnp.max(s, axis=-1, keepdims=True))
    alpha = jnp.exp(m_prev - m_new)
    # exp kept in f32 for cross-generation safety (v5e has no bf16 EUP path).
    p = jnp.exp(s - m_new)                                   # (nh, tq, tk) f32
    l_sc[...] = alpha * l_sc[...] + jnp.sum(p, axis=-1, keepdims=True)
    pv = jnp.einsum('hqk,hkd->hqd', p.astype(compute_dtype), v,
                    preferred_element_type=jnp.float32)      # (nh, tq, hd)
    acc_sc[...] = alpha * acc_sc[...] + pv
    m_sc[...] = m_new

    # TODO(synk): additive attention_mask and train-mode dropout not implemented.

    @pl.when(ki == nk - 1)
    def _finalize():
        # Exact normalization (the approx reciprocal caused the f32 mismatch).
        ctx = acc_sc[...] / l_sc[...]                        # (nh, tq, hd) f32
        # Concatenate heads along lanes -> one lane-dense (tq, H) store.
        out_tile = jnp.concatenate([ctx[h] for h in range(num_heads)], axis=-1)
        o_ref[0] = out_tile.astype(o_ref.dtype)


# --------------------------------------------------------------------------- #
# Wrapper                                                                     #
# --------------------------------------------------------------------------- #
def attention_forward(hidden_a, hidden_b, params, *, num_heads,
                      block_q=256, block_k=256, block_proj=256,
                      compute_dtype=jnp.bfloat16, vmem_limit_bytes=None):
    """hidden_a: (B, Sa, H), hidden_b: (B, Sb, H) -> (B, Sa, H)."""
    B, Sa, H = hidden_a.shape
    Bb, Sb, Hb = hidden_b.shape
    assert Bb == B and Hb == H
    assert H % num_heads == 0
    head_dim = H // num_heads
    out_dtype = hidden_a.dtype

    tq = min(block_q, Sa)
    tk = min(block_k, Sb)
    assert Sa % tq == 0, f"Sa={Sa} must be divisible by q tile {tq}"
    assert Sb % tk == 0, f"Sb={Sb} must be divisible by kv tile {tk}"

    # Host-side parameter packing: fold 1/sqrt(head_dim) into the Q projection,
    # fuse K|V weights/biases, cast MXU inputs to compute_dtype (bf16 default).
    scale = 1.0 / math.sqrt(head_dim)
    wq = (params['wq'] * scale).astype(compute_dtype)
    bq = (params['bq'] * scale).astype(jnp.float32)
    wkv = jnp.concatenate([params['wk'], params['wv']], axis=1).astype(compute_dtype)
    bkv = jnp.concatenate([params['bk'], params['bv']], axis=1).astype(jnp.float32)
    a = hidden_a.astype(compute_dtype)
    b = hidden_b.astype(compute_dtype)

    # --- Projections (each input row projected exactly once). ---------------
    q = _linear(a, wq, bq, tile_s=block_proj, out_dtype=compute_dtype)       # (B, Sa, H)
    kv = _linear(b, wkv, bkv, tile_s=block_proj, out_dtype=compute_dtype)    # (B, Sb, 2H)
    k, v = kv[..., :H], kv[..., H:]

    # --- Head split (transpose_for_scores): layout plumbing, done once. -----
    def to_heads(x, S):
        return x.reshape(B, S, num_heads, head_dim).transpose(0, 2, 1, 3)
    q_h = to_heads(q, Sa)                                    # (B, nh, Sa, hd)
    k_h = to_heads(k, Sb)
    v_h = to_heads(v, Sb)

    # --- VMEM budget (explicit for v7x's 64 MiB; generous but bounded). -----
    if vmem_limit_bytes is None:
        cdt = jnp.dtype(compute_dtype).itemsize
        odt = jnp.dtype(out_dtype).itemsize
        blocks = 2 * cdt * num_heads * head_dim * (tq + 2 * tk)   # 2x-buffered q,k,v tiles
        blocks += 2 * odt * tq * H                                 # 2x-buffered out tile
        scratch = 4 * num_heads * tq * (head_dim + 2)              # m, l, acc (f32)
        live = 2 * 4 * num_heads * tq * tk                         # s, p intermediates
        est = int(1.25 * (blocks + scratch + live)) + (2 << 20)
        vmem_limit_bytes = max(32 << 20, min(est, 96 << 20))

    kernel = partial(_flash_attn_kernel, num_heads=num_heads,
                     compute_dtype=compute_dtype)
    grid = (B, Sa // tq, Sb // tk)

    out = pl.pallas_call(
        kernel,
        out_shape=jax.ShapeDtypeStruct((B, Sa, H), out_dtype),
        grid_spec=pltpu.PrefetchScalarGridSpec(
            num_scalar_prefetch=0,
            grid=grid,
            in_specs=[
                pl.BlockSpec((1, num_heads, tq, head_dim),
                             lambda bi, qi, ki: (bi, 0, qi, 0)),   # Q tile
                pl.BlockSpec((1, num_heads, tk, head_dim),
                             lambda bi, qi, ki: (bi, 0, ki, 0)),   # K tile
                pl.BlockSpec((1, num_heads, tk, head_dim),
                             lambda bi, qi, ki: (bi, 0, ki, 0)),   # V tile
            ],
            out_specs=pl.BlockSpec((1, tq, H), lambda bi, qi, ki: (bi, qi, 0)),
            scratch_shapes=[
                pltpu.VMEM((num_heads, tq, 1), jnp.float32),          # running max m
                pltpu.VMEM((num_heads, tq, 1), jnp.float32),          # running denom l
                pltpu.VMEM((num_heads, tq, head_dim), jnp.float32),   # context acc
            ],
        ),
        compiler_params=pltpu.CompilerParams(
            dimension_semantics=("parallel", "parallel", "arbitrary"),
            vmem_limit_bytes=vmem_limit_bytes),
    )(q_h, k_h, v_h)
    return out


# --------------------------------------------------------------------------- #
# Pure-JAX reference (mirrors the PyTorch forward, eval mode).                #
# --------------------------------------------------------------------------- #
def reference_forward(hidden_a, hidden_b, params, *, num_heads):
    B, Sa, H = hidden_a.shape
    _, Sb, _ = hidden_b.shape
    hd = H // num_heads
    prec = jax.lax.Precision.HIGHEST

    def proj(x, w, b):
        return jnp.einsum('bsh,hk->bsk', x, w, precision=prec) + b[0]

    q = proj(hidden_a, params['wq'], params['bq'])
    k = proj(hidden_b, params['wk'], params['bk'])
    v = proj(hidden_b, params['wv'], params['bv'])

    def split(x, s):
        return x.reshape(B, s, num_heads, hd).transpose(0, 2, 1, 3)

    q, k, v = split(q, Sa), split(k, Sb), split(v, Sb)
    scores = jnp.einsum('bhqd,bhkd->bhqk', q, k, precision=prec) / math.sqrt(hd)
    probs = jax.nn.softmax(scores, axis=-1)
    ctx = jnp.einsum('bhqk,bhkd->bhqd', probs, v, precision=prec)
    return ctx.transpose(0, 2, 1, 3).reshape(B, Sa, H)


def _make_params(key, H):
    ks = jax.random.split(key, 6)
    s = 1.0 / math.sqrt(H)
    return {
        'wq': jax.random.normal(ks[0], (H, H), jnp.float32) * s,
        'bq': jax.random.normal(ks[1], (1, H), jnp.float32) * 0.01,
        'wk': jax.random.normal(ks[2], (H, H), jnp.float32) * s,
        'bk': jax.random.normal(ks[3], (1, H), jnp.float32) * 0.01,
        'wv': jax.random.normal(ks[4], (H, H), jnp.float32) * s,
        'bv': jax.random.normal(ks[5], (1, H), jnp.float32) * 0.01,
    }


if __name__ == "__main__":
    root = jax.random.PRNGKey(0)
    k_small, k_big = jax.random.split(root, 2)

    # ---- Test 1: small config consistent with the module (hidden=32, 4 heads),
    #      cross-attention with different Sa/Sb, full f32 path, tight tolerance.
    B, Sa, Sb, H, nh = 2, 8, 16, 32, 4
    ka, kb, kp = jax.random.split(k_small, 3)
    ha = jax.random.normal(ka, (B, Sa, H), jnp.float32)
    hb = jax.random.normal(kb, (B, Sb, H), jnp.float32)
    params = _make_params(kp, H)

    out = attention_forward(ha, hb, params, num_heads=nh,
                            compute_dtype=jnp.float32)
    out = jax.block_until_ready(out)
    ref = reference_forward(ha, hb, params, num_heads=nh)
    assert out.shape == (B, Sa, H)
    err = float(jnp.max(jnp.abs(out - ref)))
    assert jnp.allclose(out, ref, atol=5e-4, rtol=5e-4), f"f32 small err={err}"

    # ---- Test 2: larger seq with 128-wide tiles -> grid (2,2,2), exercises the
    #      online-softmax accumulation across multiple KV tiles (f32 path).
    B2, S2, H2, nh2 = 2, 256, 128, 4
    ka2, kb2, kp2 = jax.random.split(k_big, 3)
    ha2 = jax.random.normal(ka2, (B2, S2, H2), jnp.float32)
    hb2 = jax.random.normal(kb2, (B2, S2, H2), jnp.float32)
    params2 = _make_params(kp2, H2)

    out2 = attention_forward(ha2, hb2, params2, num_heads=nh2,
                             block_q=128, block_k=128,
                             compute_dtype=jnp.float32)
    out2 = jax.block_until_ready(out2)
    ref2 = reference_forward(ha2, hb2, params2, num_heads=nh2)
    err2 = float(jnp.max(jnp.abs(out2 - ref2)))
    assert jnp.allclose(out2, ref2, atol=1e-3, rtol=1e-3), f"f32 tiled err={err2}"

    # ---- Test 3: default path (bf16 MXU inputs, f32 accumulation, 256 tiles).
    out3 = attention_forward(ha2, hb2, params2, num_heads=nh2)
    out3 = jax.block_until_ready(out3)
    err3 = float(jnp.max(jnp.abs(out3 - ref2)))
    assert jnp.allclose(out3, ref2, atol=6e-2, rtol=6e-2), f"bf16 err={err3}"

    print("KERNEL_OK")
</pallas_src>

<mosaic_0001>
module attributes {stable_mosaic.version = 11 : i64} {
  func.func @_linear_kernel(%arg0: i32, %arg1: i32, %arg2: memref<1x8x32xf32, #tpu.memory_space<vmem>>, %arg3: memref<32x32xf32, #tpu.memory_space<vmem>>, %arg4: memref<1x32xf32, #tpu.memory_space<vmem>>, %arg5: memref<1x8x32xf32, #tpu.memory_space<vmem>>) attributes {dimension_semantics = [#tpu.dimension_semantics<parallel>, #tpu.dimension_semantics<parallel>], iteration_bounds = array<i64: 2, 1>, scalar_prefetch = 0 : i64, scratch_operands = 0 : i64, tpu.core_type = #tpu.core_type<tc>, window_params = [{transform_indices = @transform_0, window_bounds = array<i64: 1, 8, 32>}, {pipeline_mode = #tpu.pipeline_mode<synchronous>, transform_indices = @transform_1, window_bounds = array<i64: 32, 32>}, {pipeline_mode = #tpu.pipeline_mode<synchronous>, transform_indices = @transform_2, window_bounds = array<i64: 1, 32>}, {transform_indices = @transform_3, window_bounds = array<i64: 1, 8, 32>}]} {
    %c0 = arith.constant 0 : index
    %c0_0 = arith.constant 0 : index
    %c0_1 = arith.constant 0 : index
    %0 = vector.load %arg2[%c0, %c0_0, %c0_1] : memref<1x8x32xf32, #tpu.memory_space<vmem>>, vector<1x8x32xf32>
    %1 = vector.shape_cast %0 : vector<1x8x32xf32> to vector<8x32xf32>
    %c0_2 = arith.constant 0 : index
    %c0_3 = arith.constant 0 : index
    %2 = vector.load %arg3[%c0_2, %c0_3] : memref<32x32xf32, #tpu.memory_space<vmem>>, vector<32x32xf32>
    %cst = arith.constant dense<0.000000e+00> : vector<8x32xf32>
    %3 = tpu.matmul %1, %2, %cst {dimension_numbers = #tpu.dot_dimension_numbers<[1], [0], [0], [1], [0, 0, 1, 1], [], []>} : vector<8x32xf32>, vector<32x32xf32>, vector<8x32xf32> -> vector<8x32xf32>
    %c0_4 = arith.constant 0 : index
    %c0_5 = arith.constant 0 : index
    %4 = vector.load %arg4[%c0_4, %c0_5] : memref<1x32xf32, #tpu.memory_space<vmem>>, vector<1x32xf32>
    %5 = vector.broadcast %4 : vector<1x32xf32> to vector<8x32xf32>
    %6 = arith.addf %3, %5 : vector<8x32xf32>
    %c0_6 = arith.constant 0 : index
    %c0_7 = arith.constant 0 : index
    %c0_8 = arith.constant 0 : index
    %7 = vector.load %arg5[%c0_6, %c0_7, %c0_8] : memref<1x8x32xf32, #tpu.memory_space<vmem>>, vector<1x8x32xf32>
    %8 = vector.shape_cast %7 : vector<1x8x32xf32> to vector<8x32xf32>
    %9 = vector.shape_cast %6 : vector<8x32xf32> to vector<1x8x32xf32>
    tpu.vector_store %arg5[%c0_6, %c0_7, %c0_8], %9 {strides = array<i32>} : memref<1x8x32xf32, #tpu.memory_space<vmem>>, vector<1x8x32xf32>,
    return
  }
  func.func @transform_0(%arg0: i32, %arg1: i32) -> (i32, i32, i32) {
    %c0_i32 = arith.constant 0 : i32
    %c0_i32_0 = arith.constant 0 : i32
    return %arg0, %arg1, %c0_i32 : i32, i32, i32
  }
  func.func @transform_1(%arg0: i32, %arg1: i32) -> (i32, i32) {
    %c0_i32 = arith.constant 0 : i32
    %c0_i32_0 = arith.constant 0 : i32
    %c0_i32_1 = arith.constant 0 : i32
    return %c0_i32, %c0_i32_0 : i32, i32
  }
  func.func @transform_2(%arg0: i32, %arg1: i32) -> (i32, i32) {
    %c0_i32 = arith.constant 0 : i32
    %c0_i32_0 = arith.constant 0 : i32
    %c0_i32_1 = arith.constant 0 : i32
    return %c0_i32, %c0_i32_0 : i32, i32
  }
  func.func @transform_3(%arg0: i32, %arg1: i32) -> (i32, i32, i32) {
    %c0_i32 = arith.constant 0 : i32
    %c0_i32_0 = arith.constant 0 : i32
    return %arg0, %arg1, %c0_i32 : i32, i32, i32
  }
}

</mosaic_0001>

<llo_original>
// kernel: tpu_custom_call.1
$region0: #{tpu_custom_call.1}
  #allocation0 [shape = 'u32[]', space=smem, size = 0x4, offset = 0x4, fixed_abs, tag = 'smem constant byte address 0x4 - core index']
  #allocation1 [shape = 'u32[144,128]{1,0:T(1,128)}', space=vmem, size = 0x12000, scoped, tag = 'internal scratch']
  %s0 = inlined_call_operand.hbm [shape: f32[2,8,32], index: 0, kind: input, shape index: {}]
  %s1 = inlined_call_operand.hbm [shape: f32[32,32], index: 1, kind: input, shape index: {}]
  %s2 = inlined_call_operand.vmem [shape: f32[1,32], index: 2, kind: input, shape index: {}]
  %s3 = inlined_call_operand.hbm [shape: f32[2,8,32], index: 3, kind: output, shape index: {}]
  %s4 = sld [smem:[#allocation0]]
  $region53: #{tpu_custom_call.1} parent=0
    _
  %s6 = ssub.s32 1, %s4
  %s7 = scalar_select 0, %s6, %s4
  $region1: #{tpu_custom_call.1} parent=0
    #allocation2 [shape = 'u8[8192]{0}', space=vmem, size = 0x2000, scoped, tag = 'input window, operand 0']
    #allocation3 [shape = 's32[2]{0}', space=sflag, size = 0x8, scoped, tag = 'scoped memory for tpu_custom_call.1']
    #allocation4 [shape = 's32[2]{0}', space=sflag, size = 0x8, scoped, tag = 'scoped memory for tpu_custom_call.1']
    #allocation5 [shape = 'u8[16384]{0}', space=vmem, size = 0x4000, scoped, tag = 'input window, operand 1, single buffered']
    #allocation6 [shape = 's32[1]{0}', space=sflag, size = 0x4, scoped, tag = 'scoped memory for tpu_custom_call.1']
    #allocation7 [shape = 'u8[8192]{0}', space=vmem, size = 0x2000, scoped, tag = 'output window, operand 0']
    %8 = vsyncpa [#allocation3], 0
    %s9 = scalar_lea.sflag [#allocation3], 1
    %10 = vsyncpa %s9, 0
    %11 = vsyncpa [#allocation6], 0
    %12 = vsyncpa [#allocation4], 0
    %s13 = scalar_lea.sflag [#allocation4], 1
    %14 = vsyncpa %s13, 0
    loop: start=0, step=1, limit=4
    $region2: #{tpu_custom_call.1} parent=1 // loop_pre_header
      _
    $region3: #{tpu_custom_call.1} parent=1 // loop_header
      %s16 = sphi 0, %s20
      %p17 = scmp.ge.s32.totalorder %s16, 4
      %s23 = sphi 0, %s35
      %s24 = sphi 0, %s31
      %s25 = sphi 0, %s23
      %s26 = sphi 0, %s24
      %s27 = sphi 0, %s25
      %s28 = sphi 0, %s26
      %s40 = sphi 0, %s42
      %s43 = sphi 0, %s40
      %s44 = sphi 0, %s43
      %s60 = sphi 0, %s44
      %s64 = sphi 0, %s64
      %s66 = sphi 0, %s64
      %s67 = sphi 0, %s66
      %s81 = sphi 0, %s67
      %s85 = sphi 0, %s85
      %s87 = sphi 0, %s85
      %s88 = sphi 0, %s87
      %s102 = sphi 0, %s88
      %s110 = sphi 0, %s112
      %s113 = sphi 0, %s110
      %s114 = sphi 0, %s113
      %s130 = sphi 0, %s114
    $region4: #{tpu_custom_call.1} parent=1 // loop_header_branch
      %19 = sbr.rel (%p17) target = $region8
    $region5: #{tpu_custom_call.1} parent=1 // loop_body
      %s21 = ssub.s32 %s16, 1
      %s22 = ssub.s32 %s16, 2
      %s29 = sadd.s32 1, %s24
      %p30 = scmp.ge.s32.totalorder %s29, 1
      %s31 = scalar_select %p30, 0, %s29
      %s32 = sadd.s32 1, %s23
      %s33 = scalar_select %p30, %s32, %s23
      %p34 = scmp.ge.s32.totalorder %s33, 2
      %s35 = scalar_select %p34, 0, %s33
      %s36 = ssub.s32 %s23, %s35
      %s37 = ssub.s32 %s24, %s31
      %s38 = sor.u32 %s36, %s37
      %p39 = scmp.eq.s32.totalorder %s38, 0
      %s41 = sadd.s32 %s40, 1
      %s42 = scalar_select %p39, %s40, %s41
      %p45 = pneg %p39
      %p46 = scmp.eq.s32.totalorder %s16, 1
      %p47 = por %p45, %p46
      %p48 = scmp.ne.s32.totalorder %s40, %s43
      %p49 = scmp.eq.s32.totalorder %s16, 0
      %p50 = por %p48, %p49
      %p51 = scmp.ne.s32.totalorder %s40, %s43
      %p52 = scmp.eq.s32.totalorder %s21, 1
      %p53 = por %p51, %p52
      %p54 = scmp.ne.s32.totalorder %s43, %s44
      %p55 = scmp.eq.s32.totalorder %s21, 0
      %p56 = por %p54, %p55
      %p57 = scmp.ne.s32.totalorder %s43, %s44
      %p58 = scmp.eq.s32.totalorder %s22, 1
      %p59 = por %p57, %p58
      %p61 = scmp.ne.s32.totalorder %s44, %s60
      %p62 = scmp.eq.s32.totalorder %s22, 0
      %p63 = por %p61, %p62
      %s65 = sadd.s32 %s64, 1
      %p68 = scmp.eq.s32.totalorder %s16, 1
      %p69 = scmp.ne.s32.totalorder %s64, %s66
      %p70 = scmp.eq.s32.totalorder %s16, 0
      %p71 = por %p69, %p70
      %p72 = scmp.ne.s32.totalorder %s64, %s66
      %p73 = scmp.eq.s32.totalorder %s21, 1
      %p74 = por %p72, %p73
      %p75 = scmp.ne.s32.totalorder %s66, %s67
      %p76 = scmp.eq.s32.totalorder %s21, 0
      %p77 = por %p75, %p76
      %p78 = scmp.ne.s32.totalorder %s66, %s67
      %p79 = scmp.eq.s32.totalorder %s22, 1
      %p80 = por %p78, %p79
      %p82 = scmp.ne.s32.totalorder %s67, %s81
      %p83 = scmp.eq.s32.totalorder %s22, 0
      %p84 = por %p82, %p83
      %s86 = sadd.s32 %s85, 1
      %p89 = scmp.eq.s32.totalorder %s16, 1
      %p90 = scmp.ne.s32.totalorder %s85, %s87
      %p91 = scmp.eq.s32.totalorder %s16, 0
      %p92 = por %p90, %p91
      %p93 = scmp.ne.s32.totalorder %s85, %s87
      %p94 = scmp.eq.s32.totalorder %s21, 1
      %p95 = por %p93, %p94
      %p96 = scmp.ne.s32.totalorder %s87, %s88
      %p97 = scmp.eq.s32.totalorder %s21, 0
      %p98 = por %p96, %p97
      %p99 = scmp.ne.s32.totalorder %s87, %s88
      %p100 = scmp.eq.s32.totalorder %s22, 1
      %p101 = por %p99, %p100
      %p103 = scmp.ne.s32.totalorder %s88, %s102
      %p104 = scmp.eq.s32.totalorder %s22, 0
      %p105 = por %p103, %p104
      %s106 = ssub.s32 %s23, %s35
      %s107 = ssub.s32 %s24, %s31
      %s108 = sor.u32 %s106, %s107
      %p109 = scmp.eq.s32.totalorder %s108, 0
      %s111 = sadd.s32 %s110, 1
      %s112 = scalar_select %p109, %s110, %s111
      %p115 = pneg %p109
      %p116 = scmp.eq.s32.totalorder %s16, 1
      %p117 = por %p115, %p116
      %p118 = scmp.ne.s32.totalorder %s110, %s113
      %p119 = scmp.eq.s32.totalorder %s16, 0
      %p120 = por %p118, %p119
      %p121 = scmp.ne.s32.totalorder %s110, %s113
      %p122 = scmp.eq.s32.totalorder %s21, 1
      %p123 = por %p121, %p122
      %p124 = scmp.ne.s32.totalorder %s113, %s114
      %p125 = scmp.eq.s32.totalorder %s21, 0
      %p126 = por %p124, %p125
      %p127 = scmp.ne.s32.totalorder %s113, %s114
      %p128 = scmp.eq.s32.totalorder %s22, 1
      %p129 = por %p127, %p128
      %p131 = scmp.ne.s32.totalorder %s114, %s130
      %p132 = scmp.eq.s32.totalorder %s22, 0
      %p133 = por %p131, %p132
      %p134 = scmp.le.s32.totalorder 1, %s16
      %p135 = scmp.lt.s32.totalorder %s16, 3
      %p136 = pnand %p134, %p135
      %p137 = pneg %p136
      // Predicated region
      $region9: #{tpu_custom_call.1} parent=5 // pred_check
        _
      $region10: #{tpu_custom_call.1} parent=5 // pred_check_branch
        %139 = sbr.rel (%p136) target = $region12
      $region11: #{tpu_custom_call.1} parent=5 // pred_region
        %s140 = ssub.s32 %s16, 1
        // Predicated region
        $region13: #{tpu_custom_call.1} parent=11 // pred_check
          %p141 = pneg %p77
        $region14: #{tpu_custom_call.1} parent=11 // pred_check_branch
          %143 = sbr.rel (%p141) target = $region16
        $region15: #{tpu_custom_call.1} parent=11 // pred_region
          %s145 = ssub.s32 512, 512
          %146 = vsyncadd [#allocation6], %s145
          %s147 = sshll.u32 [#allocation5], 4
          %s148 = int_to_ptr.vmem [resolvable:$true] %s147
          %153 = dma.hbm_to_vmem [thread:$0]  %s1, 512, %s148, [#allocation6], 128, 128, 8
        $region16: #{tpu_custom_call.1} parent=11 // pred_fallthru
          _
        // Predicated region
        $region17: #{tpu_custom_call.1} parent=11 // pred_check
          %p154 = pneg %p98
        $region18: #{tpu_custom_call.1} parent=11 // pred_check_branch
          %156 = sbr.rel (%p154) target = $region20
        $region19: #{tpu_custom_call.1} parent=11 // pred_region
          _
        $region20: #{tpu_custom_call.1} parent=11 // pred_fallthru
          _
      $region12: #{tpu_custom_call.1} parent=5 // pred_fallthru
        _
      %p157 = scmp.lt.s32.totalorder %s16, 2
      // Predicated region
      $region21: #{tpu_custom_call.1} parent=5 // pred_check
        %p158 = pneg %p157
      $region22: #{tpu_custom_call.1} parent=5 // pred_check_branch
        %160 = sbr.rel (%p158) target = $region24
      $region23: #{tpu_custom_call.1} parent=5 // pred_region
        // Predicated region
        $region25: #{tpu_custom_call.1} parent=23 // pred_check
          %p161 = pneg %p50
        $region26: #{tpu_custom_call.1} parent=23 // pred_check_branch
          %163 = sbr.rel (%p161) target = $region28
        $region27: #{tpu_custom_call.1} parent=23 // pred_region
          %s164 = sand.u32 %s40, 1
          %s165 = scalar_lea.sflag [#allocation3], %s164
          %s166 = sand.u32 %s40, 1
          %s167 = smul.addr %s166, 8
          %s168 = scalar_lea.vmem [#allocation2], %s167
          %s170 = ssub.s32 128, 128
          %171 = vsyncadd %s165, %s170
          %s172 = sadd.s32 %s24, %s23
          %s173 = smul.addr %s172, 128
          %s174 = scalar_lea.hbm %s0, %s173
          %s176 = sshll.u32 %s168, 4
          %s177 = int_to_ptr.vmem [resolvable:$true] %s176
          %179 = dma.hbm_to_vmem [thread:$0]  %s174, 128, %s177, %s165
        $region28: #{tpu_custom_call.1} parent=23 // pred_fallthru
          _
      $region24: #{tpu_custom_call.1} parent=5 // pred_fallthru
        _
      %p180 = scmp.le.s32.totalorder 1, %s16
      %p181 = scmp.lt.s32.totalorder %s16, 3
      %p182 = pnand %p180, %p181
      %p183 = pneg %p182
      // Predicated region
      $region29: #{tpu_custom_call.1} parent=5 // pred_check
        _
      $region30: #{tpu_custom_call.1} parent=5 // pred_check_branch
        %185 = sbr.rel (%p182) target = $region32
      $region31: #{tpu_custom_call.1} parent=5 // pred_region
        %s186 = ssub.s32 %s16, 1
        %s187 = sand.u32 %s43, 1
        %s188 = scalar_lea.sflag [#allocation3], %s187
        %s189 = sand.u32 %s43, 1
        %s190 = smul.addr %s189, 8
        %s191 = scalar_lea.vmem [#allocation2], %s190
        // Predicated region
        $region33: #{tpu_custom_call.1} parent=31 // pred_check
          %p192 = pneg %p56
        $region34: #{tpu_custom_call.1} parent=31 // pred_check_branch
          %194 = sbr.rel (%p192) target = $region36
        $region35: #{tpu_custom_call.1} parent=31 // pred_region
          %195 = dma.done %s188, 128
        $region36: #{tpu_custom_call.1} parent=31 // pred_fallthru
          _
        // Predicated region
        $region37: #{tpu_custom_call.1} parent=31 // pred_check
          %p196 = pneg %p77
        $region38: #{tpu_custom_call.1} parent=31 // pred_check_branch
          %198 = sbr.rel (%p196) target = $region40
        $region39: #{tpu_custom_call.1} parent=31 // pred_region
          %199 = dma.done [#allocation6], 512
        $region40: #{tpu_custom_call.1} parent=31 // pred_fallthru
          _
        %s200 = sand.u32 %s43, 1
        %s201 = scalar_lea.sflag [#allocation3], %s200
        %s202 = sand.u32 %s43, 1
        %s203 = smul.addr %s202, 8
        %s204 = scalar_lea.vmem [#allocation2], %s203
        %p205 = pneg %p56
        %p206 = pneg %p53
        %p207 = pneg %p77
        %p208 = pneg %p74
        %p209 = pneg %p98
        %p210 = pneg %p95
        %p211 = pneg %p126
        %p212 = pneg %p123
        %s213 = sand.u32 %s113, 1
        %s214 = scalar_lea.sflag [#allocation4], %s213
        %s215 = sand.u32 %s113, 1
        %s216 = smul.addr %s215, 8
        %s217 = scalar_lea.vmem [#allocation7], %s216
        %v218 = vld [vmem:[%s191] sm:$0xff]
        %v219 = vld [vmem:[#allocation5] sm:$0xff]
        %v220 = vld [vmem:[#allocation5 + $0x8] sm:$0xff]
        %v221 = vld [vmem:[#allocation5 + $0x10] sm:$0xff]
        %v222 = vld [vmem:[#allocation5 + $0x18] sm:$0xff]
        %v223 = vld [vmem:[%s2] sm:$0x1]
        %v225 = vlaneseq
        %v226 = vshrl.u32 %v225, 7
        %v227 = vsub.s32 0, %v226
        %v228 = vrot.slane %v223, %v227
        %vm230 = vcmask 261120
        %v232 = vsel %vm230, %v218, 0
        %234 = vmatprep.subr.mxu0 0.0
        %235 = vmatpush1.msra.mxu0 0.0
        %236 = vmatprep.subr.mxu0 0.0
        %237 = vmatpush1.msra.mxu0 0.0
        %238 = vmatprep.subr.mxu0 0.0
        %239 = vmatpush1.msra.mxu0 0.0
        %240 = vmatprep.subr.mxu0 0.0
        %241 = vmatpush1.msra.mxu0 0.0
        %242 = vmatprep.subr.mxu0 0.0
        %243 = vmatpush1.msra.mxu0 0.0
        %244 = vmatprep.subr.mxu0 0.0
        %245 = vmatpush1.msra.mxu0 0.0
        %246 = vmatprep.subr.mxu0 0.0
        %247 = vmatpush1.msra.mxu0 0.0
        %248 = vmatprep.subr.mxu0 0.0
        %249 = vmatpush1.msra.mxu0 0.0
        %250 = vmatprep.subr.mxu0 0.0
        %251 = vmatpush1.msra.mxu0 0.0
        %252 = vmatprep.subr.mxu0 0.0
        %253 = vmatpush1.msra.mxu0 0.0
        %254 = vmatprep.subr.mxu0 0.0
        %255 = vmatpush1.msra.mxu0 0.0
        %256 = vmatprep.subr.mxu0 0.0
        %257 = vmatpush1.msra.mxu0 0.0
        %258 = vmatprep.subr.mxu0 0.0
        %259 = vmatpush1.msra.mxu0 %v222
        %260 = vmatprep.subr.mxu0 0.0
        %261 = vmatpush1.msra.mxu0 %v221
        %262 = vmatprep.subr.mxu0 0.0
        %263 = vmatpush1.msra.mxu0 %v220
        %264 = vmatprep.subr.mxu0 0.0
        %265 = vmatpush1.msra.mxu0 %v219
        %266 = vmatprep.subr.mxu0 0.0
        %267 = vmatpush2.msra.mxu0 0.0
        %268 = vmatprep.subr.mxu0 0.0
        %269 = vmatpush2.msra.mxu0 0.0
        %270 = vmatprep.subr.mxu0 0.0
        %271 = vmatpush2.msra.mxu0 0.0
        %272 = vmatprep.subr.mxu0 0.0
        %273 = vmatpush2.msra.mxu0 0.0
        %274 = vmatprep.subr.mxu0 0.0
        %275 = vmatpush2.msra.mxu0 0.0
        %276 = vmatprep.subr.mxu0 0.0
        %277 = vmatpush2.msra.mxu0 0.0
        %278 = vmatprep.subr.mxu0 0.0
        %279 = vmatpush2.msra.mxu0 0.0
        %280 = vmatprep.subr.mxu0 0.0
        %281 = vmatpush2.msra.mxu0 0.0
        %282 = vmatprep.subr.mxu0 0.0
        %283 = vmatpush2.msra.mxu0 0.0
        %284 = vmatprep.subr.mxu0 0.0
        %285 = vmatpush2.msra.mxu0 0.0
        %286 = vmatprep.subr.mxu0 0.0
        %287 = vmatpush2.msra.mxu0 0.0
        %288 = vmatprep.subr.mxu0 0.0
        %289 = vmatpush2.msra.mxu0 0.0
        %290 = vmatprep.subr.mxu0 0.0
        %291 = vmatpush2.msra.mxu0 0.0
        %292 = vmatprep.subr.mxu0 0.0
        %293 = vmatpush2.msra.mxu0 0.0
        %294 = vmatprep.subr.mxu0 0.0
        %295 = vmatpush2.msra.mxu0 0.0
        %296 = vmatprep.subr.mxu0 0.0
        %297 = vmatpush2.msra.mxu0 0.0
        %298 = vmatprep.mubr.f32.mxu0 0.0
        %299 = vmatmul.mubr.f32.gmra.mxu0 %v232
        %v300 = vpop.f32.mrf.mxu0
        %v301 = vadd.f32 %v228, %v300
        %v302 = vpop.f32.mrf.mxu0
        %303 = vdwg.mxu0
        %304 = vst.msk [vmem:[%s217] sm:$0xff] %vm230, %v301
        %s305 = sand.u32 %s113, 1
        %s306 = scalar_lea.sflag [#allocation4], %s305
        %s307 = sand.u32 %s113, 1
        %s308 = smul.addr %s307, 8
        %s309 = scalar_lea.vmem [#allocation7], %s308
        // Predicated region
        $region41: #{tpu_custom_call.1} parent=31 // pred_check
          %p310 = pneg %p123
        $region42: #{tpu_custom_call.1} parent=31 // pred_check_branch
          %312 = sbr.rel (%p310) target = $region44
        $region43: #{tpu_custom_call.1} parent=31 // pred_region
          %s314 = ssub.s32 128, 128
          %315 = vsyncadd %s306, %s314
          %s316 = sadd.s32 %s26, %s25
          %s317 = smul.addr %s316, 128
          %s318 = scalar_lea.hbm %s3, %s317
          %s320 = sshll.u32 %s309, 4
          %s321 = int_to_ptr.vmem [resolvable:$true] %s320
          %323 = dma.vmem_to_hbm [thread:$0]  %s321, 128, %s318, %s306
        $region44: #{tpu_custom_call.1} parent=31 // pred_fallthru
          _
      $region32: #{tpu_custom_call.1} parent=5 // pred_fallthru
        _
      %p324 = scmp.le.s32.totalorder 2, %s16
      // Predicated region
      $region45: #{tpu_custom_call.1} parent=5 // pred_check
        %p325 = pneg %p324
      $region46: #{tpu_custom_call.1} parent=5 // pred_check_branch
        %327 = sbr.rel (%p325) target = $region48
      $region47: #{tpu_custom_call.1} parent=5 // pred_region
        %s328 = ssub.s32 %s16, 2
        // Predicated region
        $region49: #{tpu_custom_call.1} parent=47 // pred_check
          %p329 = pneg %p129
        $region50: #{tpu_custom_call.1} parent=47 // pred_check_branch
          %331 = sbr.rel (%p329) target = $region52
        $region51: #{tpu_custom_call.1} parent=47 // pred_region
          %s332 = sand.u32 %s114, 1
          %s333 = scalar_lea.sflag [#allocation4], %s332
          %s334 = sand.u32 %s114, 1
          %s335 = smul.addr %s334, 8
          %s336 = scalar_lea.vmem [#allocation7], %s335
          %337 = dma.done %s333, 128
        $region52: #{tpu_custom_call.1} parent=47 // pred_fallthru
          _
      $region48: #{tpu_custom_call.1} parent=5 // pred_fallthru
        _
    $region6: #{tpu_custom_call.1} parent=1 // loop_footer
      %s20 = sadd.s32 1, %s16
    $region7: #{tpu_custom_call.1} parent=1 // loop_footer_branch
      %15 = sbr.rel target = $region3
    $region8: #{tpu_custom_call.1} parent=1 // loop_exit
      _
    %338 = vsyncpa [#allocation3], 1
    %s339 = scalar_lea.sflag [#allocation3], 1
    %340 = vsyncpa %s339, 1
    %341 = vsyncpa [#allocation6], 1
    %342 = vsyncpa [#allocation4], 1
    %s343 = scalar_lea.sflag [#allocation4], 1
    %344 = vsyncpa %s343, 1

</llo_original>
